<compile_context>
chip_gen: v7x
topology: tpu7x:2x2x1
jax: 0.10.0
libtpu: 0.0.40
codegen_flags: <defaults>
</compile_context>

<pallas_src>
import jax
import jax.numpy as jnp
from jax.experimental import pallas as pl
from jax.experimental.pallas import tpu as pltpu


def _round_up(n, m):
    return ((n + m - 1) // m) * m


def rfc_kernel(x_ref, w1_ref, b1_ref, w2_ref, b2_ref, o_ref):
    # x tile stays f32 for the residual add; only the matmul operands are bf16.
    x = x_ref[...]                                            # (tile_b, D) f32

    # fc1: bf16 x bf16 -> f32 accumulate on the MXU, then f32 bias + relu (VPU).
    h = jnp.dot(x.astype(jnp.bfloat16), w1_ref[...],
                preferred_element_type=jnp.float32)
    h = jnp.maximum(h + b1_ref[...], 0.0)                     # b1 is (1, D): broadcasts

    # fc2: same pattern.
    h2 = jnp.dot(h.astype(jnp.bfloat16), w2_ref[...],
                 preferred_element_type=jnp.float32)
    h2 = jnp.maximum(h2 + b2_ref[...], 0.0)

    # Residual uses the original (un-quantized) f32 x.
    o_ref[...] = (h2 + x).astype(o_ref.dtype)


def rfc_forward(x, w1, b1, w2, b2, *, tile_b=128):
    """x: (B, D) float32. w1/w2: torch-style (D_out, D_in). b1/b2: (D,)."""
    B, D = x.shape

    # Pre-transpose weights so the kernel computes x @ W_t (== torch x @ W.T),
    # and cast matmul operands to bf16 (halves weight DMA bytes + VMEM).
    w1_t = w1.T.astype(jnp.bfloat16)          # (D, D)
    w2_t = w2.T.astype(jnp.bfloat16)          # (D, D)
    b1_r = b1.reshape(1, D).astype(jnp.float32)
    b2_r = b2.reshape(1, D).astype(jnp.float32)

    # Tile the batch: multiple of 8 sublanes, no hard divisibility assert —
    # pad the batch to a whole number of tiles instead.
    tile_b = max(8, min(int(tile_b), _round_up(B, 8)))
    tile_b = _round_up(tile_b, 8)
    n_tiles = pl.cdiv(B, tile_b)
    Bp = n_tiles * tile_b
    x_p = x if Bp == B else jnp.pad(x, ((0, Bp - B), (0, 0)))

    # Advisory cost estimate for the XLA scheduler.
    flops = 2 * 2 * Bp * D * D                       # two (Bp,D)x(D,D) matmuls
    bytes_accessed = (
        Bp * D * 4            # x in
        + Bp * D * 4          # out
        + 2 * D * D * 2       # two bf16 weights
        + 2 * D * 4           # two f32 biases
    )
    cost = pl.CostEstimate(flops=flops, transcendentals=0,
                           bytes_accessed=bytes_accessed)

    # VMEM budget: weights + biases + x/out tiles, x2 for default double
    # buffering, x2 headroom, clamped to a range that is safe on v5e/v6e/v7x.
    budget = 2 * (2 * (2 * D * D * 2) + 2 * 2 * (tile_b * D * 4)
                  + 2 * 2 * (D * 4)) + (1 << 20)
    vmem_limit = int(min(max(budget, 32 * 1024 * 1024), 48 * 1024 * 1024))

    # NOTE: the constant-index weight/bias specs would ideally use
    # pipeline_mode=pl.Buffered(1) (double-buffering a constant block buys
    # nothing), and for D >~ 2K the weights should be K-tiled with an
    # 'arbitrary' reduction axis + f32 VMEM accumulator to fit v7x's 64 MiB
    # VMEM.  At D=128 both are irrelevant, so we keep the simple resident form.
    out = pl.pallas_call(
        rfc_kernel,
        out_shape=jax.ShapeDtypeStruct((Bp, D), x.dtype),
        grid=(n_tiles,),
        in_specs=[
            pl.BlockSpec((tile_b, D), lambda i: (i, 0)),   # x tile (pipelined)
            pl.BlockSpec((D, D), lambda i: (0, 0)),        # w1_t (VMEM-resident)
            pl.BlockSpec((1, D), lambda i: (0, 0)),        # b1
            pl.BlockSpec((D, D), lambda i: (0, 0)),        # w2_t (VMEM-resident)
            pl.BlockSpec((1, D), lambda i: (0, 0)),        # b2
        ],
        out_specs=pl.BlockSpec((tile_b, D), lambda i: (i, 0)),
        compiler_params=pltpu.CompilerParams(
            dimension_semantics=("parallel",),   # batch tiles shard across TCs
            vmem_limit_bytes=vmem_limit,
        ),
        cost_estimate=cost,
        input_output_aliases={0: 0},             # reuse x's HBM buffer for out
    )(x_p, w1_t, b1_r, w2_t, b2_r)

    return out if Bp == B else out[:B]


def rfc_reference_f32(x, w1, b1, w2, b2):
    h = jnp.maximum(x @ w1.T + b1, 0.0)
    h = jnp.maximum(h @ w2.T + b2, 0.0)
    return h + x


def rfc_reference_bf16(x, w1, b1, w2, b2):
    # Same numerics as the kernel: bf16 matmul operands, f32 accumulate/epilogue.
    h = jnp.dot(x.astype(jnp.bfloat16), w1.T.astype(jnp.bfloat16),
                preferred_element_type=jnp.float32)
    h = jnp.maximum(h + b1, 0.0)
    h2 = jnp.dot(h.astype(jnp.bfloat16), w2.T.astype(jnp.bfloat16),
                 preferred_element_type=jnp.float32)
    h2 = jnp.maximum(h2 + b2, 0.0)
    return h2 + x


if __name__ == "__main__":
    key = jax.random.PRNGKey(0)
    # RFC(dim=128); batch large enough for two 128-row grid steps (v7x megacore).
    B, D = 256, 128

    kx, kw1, kb1, kw2, kb2 = jax.random.split(key, 5)
    x = jax.random.normal(kx, (B, D), dtype=jnp.float32)

    # Deterministic synthetic params (torch Linear shapes: weight (D, D), bias (D,))
    bound = 1.0 / (D ** 0.5)
    w1 = jax.random.uniform(kw1, (D, D), jnp.float32, -bound, bound)
    b1 = jax.random.uniform(kb1, (D,), jnp.float32, -bound, bound)
    w2 = jax.random.uniform(kw2, (D, D), jnp.float32, -bound, bound)
    b2 = jax.random.uniform(kb2, (D,), jnp.float32, -bound, bound)

    out = jax.block_until_ready(rfc_forward(x, w1, b1, w2, b2, tile_b=128))
    assert out.shape == (B, D)

    # Tight check against a reference using identical bf16-operand math.
    ref_bf16 = rfc_reference_bf16(x, w1, b1, w2, b2)
    assert jnp.allclose(out, ref_bf16, atol=1e-4, rtol=1e-4), "mismatch vs bf16 reference"

    # Looser sanity check against the pure-f32 PyTorch-equivalent reference
    # (bf16 matmul operands introduce ~1e-3-scale error vs full f32).
    ref_f32 = rfc_reference_f32(x, w1, b1, w2, b2)
    assert jnp.allclose(out, ref_f32, atol=5e-2, rtol=5e-2), "mismatch vs f32 reference"

    print("KERNEL_OK")
</pallas_src>

<mosaic_0001>
module attributes {stable_mosaic.version = 11 : i64} {
  func.func @rfc_kernel(%arg0: i32, %arg1: memref<128x128xf32, #tpu.memory_space<vmem>>, %arg2: memref<128x128xbf16, #tpu.memory_space<vmem>>, %arg3: memref<1x128xf32, #tpu.memory_space<vmem>>, %arg4: memref<128x128xbf16, #tpu.memory_space<vmem>>, %arg5: memref<1x128xf32, #tpu.memory_space<vmem>>, %arg6: memref<128x128xf32, #tpu.memory_space<vmem>>) attributes {dimension_semantics = [#tpu.dimension_semantics<parallel>], iteration_bounds = array<i64: 2>, scalar_prefetch = 0 : i64, scratch_operands = 0 : i64, tpu.core_type = #tpu.core_type<tc>, window_params = [{transform_indices = @transform_0, window_bounds = array<i64: 128, 128>}, {pipeline_mode = #tpu.pipeline_mode<synchronous>, transform_indices = @transform_1, window_bounds = array<i64: 128, 128>}, {pipeline_mode = #tpu.pipeline_mode<synchronous>, transform_indices = @transform_2, window_bounds = array<i64: 1, 128>}, {pipeline_mode = #tpu.pipeline_mode<synchronous>, transform_indices = @transform_3, window_bounds = array<i64: 128, 128>}, {pipeline_mode = #tpu.pipeline_mode<synchronous>, transform_indices = @transform_4, window_bounds = array<i64: 1, 128>}, {transform_indices = @transform_5, window_bounds = array<i64: 128, 128>}]} {
    %c0 = arith.constant 0 : index
    %c0_0 = arith.constant 0 : index
    %0 = vector.load %arg1[%c0, %c0_0] : memref<128x128xf32, #tpu.memory_space<vmem>>, vector<128x128xf32>
    %1 = arith.truncf %0 : vector<128x128xf32> to vector<128x128xbf16>
    %c0_1 = arith.constant 0 : index
    %c0_2 = arith.constant 0 : index
    %2 = vector.load %arg2[%c0_1, %c0_2] : memref<128x128xbf16, #tpu.memory_space<vmem>>, vector<128x128xbf16>
    %cst = arith.constant dense<0.000000e+00> : vector<128x128xf32>
    %3 = tpu.matmul %1, %2, %cst {dimension_numbers = #tpu.dot_dimension_numbers<[1], [0], [0], [1], [0, 0, 1, 1], [], []>} : vector<128x128xbf16>, vector<128x128xbf16>, vector<128x128xf32> -> vector<128x128xf32>
    %c0_3 = arith.constant 0 : index
    %c0_4 = arith.constant 0 : index
    %4 = vector.load %arg3[%c0_3, %c0_4] : memref<1x128xf32, #tpu.memory_space<vmem>>, vector<1x128xf32>
    %5 = vector.broadcast %4 : vector<1x128xf32> to vector<128x128xf32>
    %6 = arith.addf %3, %5 : vector<128x128xf32>
    %cst_5 = arith.constant 0.000000e+00 : f32
    %7 = vector.broadcast %cst_5 : f32 to vector<128x128xf32>
    %8 = arith.maximumf %6, %7 : vector<128x128xf32>
    %9 = arith.truncf %8 : vector<128x128xf32> to vector<128x128xbf16>
    %c0_6 = arith.constant 0 : index
    %c0_7 = arith.constant 0 : index
    %10 = vector.load %arg4[%c0_6, %c0_7] : memref<128x128xbf16, #tpu.memory_space<vmem>>, vector<128x128xbf16>
    %cst_8 = arith.constant dense<0.000000e+00> : vector<128x128xf32>
    %11 = tpu.matmul %9, %10, %cst_8 {dimension_numbers = #tpu.dot_dimension_numbers<[1], [0], [0], [1], [0, 0, 1, 1], [], []>} : vector<128x128xbf16>, vector<128x128xbf16>, vector<128x128xf32> -> vector<128x128xf32>
    %c0_9 = arith.constant 0 : index
    %c0_10 = arith.constant 0 : index
    %12 = vector.load %arg5[%c0_9, %c0_10] : memref<1x128xf32, #tpu.memory_space<vmem>>, vector<1x128xf32>
    %13 = vector.broadcast %12 : vector<1x128xf32> to vector<128x128xf32>
    %14 = arith.addf %11, %13 : vector<128x128xf32>
    %cst_11 = arith.constant 0.000000e+00 : f32
    %15 = vector.broadcast %cst_11 : f32 to vector<128x128xf32>
    %16 = arith.maximumf %14, %15 : vector<128x128xf32>
    %17 = arith.addf %16, %0 : vector<128x128xf32>
    %c0_12 = arith.constant 0 : index
    %c0_13 = arith.constant 0 : index
    %18 = vector.load %arg6[%c0_12, %c0_13] : memref<128x128xf32, #tpu.memory_space<vmem>>, vector<128x128xf32>
    tpu.vector_store %arg6[%c0_12, %c0_13], %17 {strides = array<i32>} : memref<128x128xf32, #tpu.memory_space<vmem>>, vector<128x128xf32>,
    return
  }
  func.func @transform_0(%arg0: i32) -> (i32, i32) {
    %c0_i32 = arith.constant 0 : i32
    %c0_i32_0 = arith.constant 0 : i32
    return %arg0, %c0_i32 : i32, i32
  }
  func.func @transform_1(%arg0: i32) -> (i32, i32) {
    %c0_i32 = arith.constant 0 : i32
    %c0_i32_0 = arith.constant 0 : i32
    %c0_i32_1 = arith.constant 0 : i32
    return %c0_i32, %c0_i32_0 : i32, i32
  }
  func.func @transform_2(%arg0: i32) -> (i32, i32) {
    %c0_i32 = arith.constant 0 : i32
    %c0_i32_0 = arith.constant 0 : i32
    %c0_i32_1 = arith.constant 0 : i32
    return %c0_i32, %c0_i32_0 : i32, i32
  }
  func.func @transform_3(%arg0: i32) -> (i32, i32) {
    %c0_i32 = arith.constant 0 : i32
    %c0_i32_0 = arith.constant 0 : i32
    %c0_i32_1 = arith.constant 0 : i32
    return %c0_i32, %c0_i32_0 : i32, i32
  }
  func.func @transform_4(%arg0: i32) -> (i32, i32) {
    %c0_i32 = arith.constant 0 : i32
    %c0_i32_0 = arith.constant 0 : i32
    %c0_i32_1 = arith.constant 0 : i32
    return %c0_i32, %c0_i32_0 : i32, i32
  }
  func.func @transform_5(%arg0: i32) -> (i32, i32) {
    %c0_i32 = arith.constant 0 : i32
    %c0_i32_0 = arith.constant 0 : i32
    return %arg0, %c0_i32 : i32, i32
  }
}

</mosaic_0001>

<llo_original>
// kernel: tpu_custom_call.1
$region0: #{tpu_custom_call.1}
  #allocation0 [shape = 'u32[]', space=smem, size = 0x4, offset = 0x4, fixed_abs, tag = 'smem constant byte address 0x4 - core index']
  #allocation1 [shape = 'u32[144,128]{1,0:T(1,128)}', space=vmem, size = 0x12000, scoped, tag = 'internal scratch']
  %s0 = inlined_call_operand.hbm [shape: f32[256,128], index: 0, kind: input, shape index: {}, may-alias: {0,5}]
  %s1 = inlined_call_operand.vmem [shape: bf16[128,128], index: 1, kind: input, shape index: {}]
  %s2 = inlined_call_operand.vmem [shape: f32[1,128], index: 2, kind: input, shape index: {}]
  %s3 = inlined_call_operand.vmem [shape: bf16[128,128], index: 3, kind: input, shape index: {}]
  %s4 = inlined_call_operand.vmem [shape: f32[1,128], index: 4, kind: input, shape index: {}]
  %s5 = inlined_call_operand.hbm [shape: f32[256,128], index: 5, kind: output, shape index: {}, may-alias: {0,5}]
  %s6 = sld [smem:[#allocation0]]
  $region57: #{tpu_custom_call.1} parent=0
    _
  %s8 = ssub.s32 1, %s6
  %s9 = scalar_select 0, %s8, %s6
  $region1: #{tpu_custom_call.1} parent=0
    #allocation2 [shape = 'u8[131072]{0}', space=vmem, size = 0x20000, scoped, tag = 'input window, operand 0']
    #allocation3 [shape = 's32[2]{0}', space=sflag, size = 0x8, scoped, tag = 'scoped memory for tpu_custom_call.1']
    #allocation4 [shape = 's32[2]{0}', space=sflag, size = 0x8, scoped, tag = 'scoped memory for tpu_custom_call.1']
    #allocation5 [shape = 'u8[131072]{0}', space=vmem, size = 0x20000, scoped, tag = 'output window, operand 0']
    %10 = vsyncpa [#allocation3], 0
    %s11 = scalar_lea.sflag [#allocation3], 1
    %12 = vsyncpa %s11, 0
    %13 = vsyncpa [#allocation4], 0
    %s14 = scalar_lea.sflag [#allocation4], 1
    %15 = vsyncpa %s14, 0
    loop: start=0, step=1, limit=4
    $region2: #{tpu_custom_call.1} parent=1 // loop_pre_header
      _
    $region3: #{tpu_custom_call.1} parent=1 // loop_header
      %s17 = sphi 0, %s21
      %p18 = scmp.ge.s32.totalorder %s17, 4
      %s27 = sphi 0, %s29
      %s30 = sphi 0, %s27
      %s31 = sphi 0, %s30
      %s47 = sphi 0, %s31
      %s51 = sphi 0, %s51
      %s53 = sphi 0, %s51
      %s54 = sphi 0, %s53
      %s68 = sphi 0, %s54
      %s72 = sphi 0, %s72
      %s74 = sphi 0, %s72
      %s75 = sphi 0, %s74
      %s89 = sphi 0, %s75
      %s93 = sphi 0, %s93
      %s95 = sphi 0, %s93
      %s96 = sphi 0, %s95
      %s110 = sphi 0, %s96
      %s114 = sphi 0, %s114
      %s116 = sphi 0, %s114
      %s117 = sphi 0, %s116
      %s131 = sphi 0, %s117
      %s137 = sphi 0, %s139
      %s140 = sphi 0, %s137
      %s141 = sphi 0, %s140
      %s157 = sphi 0, %s141
    $region4: #{tpu_custom_call.1} parent=1 // loop_header_branch
      %20 = sbr.rel (%p18) target = $region8
    $region5: #{tpu_custom_call.1} parent=1 // loop_body
      %s22 = ssub.s32 %s17, 1
      %s23 = ssub.s32 %s17, 2
      %s24 = sadd.s32 %s17, 1
      %s25 = ssub.s32 %s17, %s24
      %p26 = scmp.eq.s32.totalorder %s25, 0
      %s28 = sadd.s32 %s27, 1
      %s29 = scalar_select %p26, %s27, %s28
      %p32 = pneg %p26
      %p33 = scmp.eq.s32.totalorder %s17, 1
      %p34 = por %p32, %p33
      %p35 = scmp.ne.s32.totalorder %s27, %s30
      %p36 = scmp.eq.s32.totalorder %s17, 0
      %p37 = por %p35, %p36
      %p38 = scmp.ne.s32.totalorder %s27, %s30
      %p39 = scmp.eq.s32.totalorder %s22, 1
      %p40 = por %p38, %p39
      %p41 = scmp.ne.s32.totalorder %s30, %s31
      %p42 = scmp.eq.s32.totalorder %s22, 0
      %p43 = por %p41, %p42
      %p44 = scmp.ne.s32.totalorder %s30, %s31
      %p45 = scmp.eq.s32.totalorder %s23, 1
      %p46 = por %p44, %p45
      %p48 = scmp.ne.s32.totalorder %s31, %s47
      %p49 = scmp.eq.s32.totalorder %s23, 0
      %p50 = por %p48, %p49
      %s52 = sadd.s32 %s51, 1
      %p55 = scmp.eq.s32.totalorder %s17, 1
      %p56 = scmp.ne.s32.totalorder %s51, %s53
      %p57 = scmp.eq.s32.totalorder %s17, 0
      %p58 = por %p56, %p57
      %p59 = scmp.ne.s32.totalorder %s51, %s53
      %p60 = scmp.eq.s32.totalorder %s22, 1
      %p61 = por %p59, %p60
      %p62 = scmp.ne.s32.totalorder %s53, %s54
      %p63 = scmp.eq.s32.totalorder %s22, 0
      %p64 = por %p62, %p63
      %p65 = scmp.ne.s32.totalorder %s53, %s54
      %p66 = scmp.eq.s32.totalorder %s23, 1
      %p67 = por %p65, %p66
      %p69 = scmp.ne.s32.totalorder %s54, %s68
      %p70 = scmp.eq.s32.totalorder %s23, 0
      %p71 = por %p69, %p70
      %s73 = sadd.s32 %s72, 1
      %p76 = scmp.eq.s32.totalorder %s17, 1
      %p77 = scmp.ne.s32.totalorder %s72, %s74
      %p78 = scmp.eq.s32.totalorder %s17, 0
      %p79 = por %p77, %p78
      %p80 = scmp.ne.s32.totalorder %s72, %s74
      %p81 = scmp.eq.s32.totalorder %s22, 1
      %p82 = por %p80, %p81
      %p83 = scmp.ne.s32.totalorder %s74, %s75
      %p84 = scmp.eq.s32.totalorder %s22, 0
      %p85 = por %p83, %p84
      %p86 = scmp.ne.s32.totalorder %s74, %s75
      %p87 = scmp.eq.s32.totalorder %s23, 1
      %p88 = por %p86, %p87
      %p90 = scmp.ne.s32.totalorder %s75, %s89
      %p91 = scmp.eq.s32.totalorder %s23, 0
      %p92 = por %p90, %p91
      %s94 = sadd.s32 %s93, 1
      %p97 = scmp.eq.s32.totalorder %s17, 1
      %p98 = scmp.ne.s32.totalorder %s93, %s95
      %p99 = scmp.eq.s32.totalorder %s17, 0
      %p100 = por %p98, %p99
      %p101 = scmp.ne.s32.totalorder %s93, %s95
      %p102 = scmp.eq.s32.totalorder %s22, 1
      %p103 = por %p101, %p102
      %p104 = scmp.ne.s32.totalorder %s95, %s96
      %p105 = scmp.eq.s32.totalorder %s22, 0
      %p106 = por %p104, %p105
      %p107 = scmp.ne.s32.totalorder %s95, %s96
      %p108 = scmp.eq.s32.totalorder %s23, 1
      %p109 = por %p107, %p108
      %p111 = scmp.ne.s32.totalorder %s96, %s110
      %p112 = scmp.eq.s32.totalorder %s23, 0
      %p113 = por %p111, %p112
      %s115 = sadd.s32 %s114, 1
      %p118 = scmp.eq.s32.totalorder %s17, 1
      %p119 = scmp.ne.s32.totalorder %s114, %s116
      %p120 = scmp.eq.s32.totalorder %s17, 0
      %p121 = por %p119, %p120
      %p122 = scmp.ne.s32.totalorder %s114, %s116
      %p123 = scmp.eq.s32.totalorder %s22, 1
      %p124 = por %p122, %p123
      %p125 = scmp.ne.s32.totalorder %s116, %s117
      %p126 = scmp.eq.s32.totalorder %s22, 0
      %p127 = por %p125, %p126
      %p128 = scmp.ne.s32.totalorder %s116, %s117
      %p129 = scmp.eq.s32.totalorder %s23, 1
      %p130 = por %p128, %p129
      %p132 = scmp.ne.s32.totalorder %s117, %s131
      %p133 = scmp.eq.s32.totalorder %s23, 0
      %p134 = por %p132, %p133
      %s135 = ssub.s32 %s17, %s24
      %p136 = scmp.eq.s32.totalorder %s135, 0
      %s138 = sadd.s32 %s137, 1
      %s139 = scalar_select %p136, %s137, %s138
      %p142 = pneg %p136
      %p143 = scmp.eq.s32.totalorder %s17, 1
      %p144 = por %p142, %p143
      %p145 = scmp.ne.s32.totalorder %s137, %s140
      %p146 = scmp.eq.s32.totalorder %s17, 0
      %p147 = por %p145, %p146
      %p148 = scmp.ne.s32.totalorder %s137, %s140
      %p149 = scmp.eq.s32.totalorder %s22, 1
      %p150 = por %p148, %p149
      %p151 = scmp.ne.s32.totalorder %s140, %s141
      %p152 = scmp.eq.s32.totalorder %s22, 0
      %p153 = por %p151, %p152
      %p154 = scmp.ne.s32.totalorder %s140, %s141
      %p155 = scmp.eq.s32.totalorder %s23, 1
      %p156 = por %p154, %p155
      %p158 = scmp.ne.s32.totalorder %s141, %s157
      %p159 = scmp.eq.s32.totalorder %s23, 0
      %p160 = por %p158, %p159
      %p161 = scmp.le.s32.totalorder 1, %s17
      %p162 = scmp.lt.s32.totalorder %s17, 3
      %p163 = pnand %p161, %p162
      %p164 = pneg %p163
      // Predicated region
      $region9: #{tpu_custom_call.1} parent=5 // pred_check
        _
      $region10: #{tpu_custom_call.1} parent=5 // pred_check_branch
        %166 = sbr.rel (%p163) target = $region12
      $region11: #{tpu_custom_call.1} parent=5 // pred_region
        %s167 = ssub.s32 %s17, 1
        // Predicated region
        $region13: #{tpu_custom_call.1} parent=11 // pred_check
          %p168 = pneg %p64
        $region14: #{tpu_custom_call.1} parent=11 // pred_check_branch
          %170 = sbr.rel (%p168) target = $region16
        $region15: #{tpu_custom_call.1} parent=11 // pred_region
          _
        $region16: #{tpu_custom_call.1} parent=11 // pred_fallthru
          _
        // Predicated region
        $region17: #{tpu_custom_call.1} parent=11 // pred_check
          %p171 = pneg %p85
        $region18: #{tpu_custom_call.1} parent=11 // pred_check_branch
          %173 = sbr.rel (%p171) target = $region20
        $region19: #{tpu_custom_call.1} parent=11 // pred_region
          _
        $region20: #{tpu_custom_call.1} parent=11 // pred_fallthru
          _
        // Predicated region
        $region21: #{tpu_custom_call.1} parent=11 // pred_check
          %p174 = pneg %p106
        $region22: #{tpu_custom_call.1} parent=11 // pred_check_branch
          %176 = sbr.rel (%p174) target = $region24
        $region23: #{tpu_custom_call.1} parent=11 // pred_region
          _
        $region24: #{tpu_custom_call.1} parent=11 // pred_fallthru
          _
        // Predicated region
        $region25: #{tpu_custom_call.1} parent=11 // pred_check
          %p177 = pneg %p127
        $region26: #{tpu_custom_call.1} parent=11 // pred_check_branch
          %179 = sbr.rel (%p177) target = $region28
        $region27: #{tpu_custom_call.1} parent=11 // pred_region
          _
        $region28: #{tpu_custom_call.1} parent=11 // pred_fallthru
          _
      $region12: #{tpu_custom_call.1} parent=5 // pred_fallthru
        _
      %p180 = scmp.lt.s32.totalorder %s17, 2
      // Predicated region
      $region29: #{tpu_custom_call.1} parent=5 // pred_check
        %p181 = pneg %p180
      $region30: #{tpu_custom_call.1} parent=5 // pred_check_branch
        %183 = sbr.rel (%p181) target = $region32
      $region31: #{tpu_custom_call.1} parent=5 // pred_region
        // Predicated region
        $region33: #{tpu_custom_call.1} parent=31 // pred_check
          %p184 = pneg %p37
        $region34: #{tpu_custom_call.1} parent=31 // pred_check_branch
          %186 = sbr.rel (%p184) target = $region36
        $region35: #{tpu_custom_call.1} parent=31 // pred_region
          %s187 = sand.u32 %s27, 1
          %s188 = scalar_lea.sflag [#allocation3], %s187
          %s189 = sand.u32 %s27, 1
          %s190 = smul.addr %s189, 128
          %s191 = scalar_lea.vmem [#allocation2], %s190
          %s192 = smul.u32 16, %s17
          %s194 = ssub.s32 2048, 2048
          %195 = vsyncadd %s188, %s194
          %s196 = smul.addr %s192, 128
          %s197 = scalar_lea.hbm %s0, %s196
          %s198 = sshll.u32 %s191, 4
          %s199 = int_to_ptr.vmem [resolvable:$true] %s198
          %204 = dma.hbm_to_vmem [thread:$0]  %s197, 2048, %s199, %s188, 128, 128, 8
        $region36: #{tpu_custom_call.1} parent=31 // pred_fallthru
          _
      $region32: #{tpu_custom_call.1} parent=5 // pred_fallthru
        _
      %p205 = scmp.le.s32.totalorder 1, %s17
      %p206 = scmp.lt.s32.totalorder %s17, 3
      %p207 = pnand %p205, %p206
      %p208 = pneg %p207
      // Predicated region
      $region37: #{tpu_custom_call.1} parent=5 // pred_check
        _
      $region38: #{tpu_custom_call.1} parent=5 // pred_check_branch
        %210 = sbr.rel (%p207) target = $region40
      $region39: #{tpu_custom_call.1} parent=5 // pred_region
        %s211 = ssub.s32 %s17, 1
        %s212 = sand.u32 %s30, 1
        %s213 = scalar_lea.sflag [#allocation3], %s212
        %s214 = sand.u32 %s30, 1
        %s215 = smul.addr %s214, 128
        %s216 = scalar_lea.vmem [#allocation2], %s215
        // Predicated region
        $region41: #{tpu_custom_call.1} parent=39 // pred_check
          %p217 = pneg %p43
        $region42: #{tpu_custom_call.1} parent=39 // pred_check_branch
          %219 = sbr.rel (%p217) target = $region44
        $region43: #{tpu_custom_call.1} parent=39 // pred_region
          %220 = dma.done %s213, 2048
        $region44: #{tpu_custom_call.1} parent=39 // pred_fallthru
          _
        %s221 = sand.u32 %s30, 1
        %s222 = scalar_lea.sflag [#allocation3], %s221
        %s223 = sand.u32 %s30, 1
        %s224 = smul.addr %s223, 128
        %s225 = scalar_lea.vmem [#allocation2], %s224
        %p226 = pneg %p43
        %p227 = pneg %p40
        %p228 = pneg %p64
        %p229 = pneg %p61
        %p230 = pneg %p85
        %p231 = pneg %p82
        %p232 = pneg %p106
        %p233 = pneg %p103
        %p234 = pneg %p127
        %p235 = pneg %p124
        %p236 = pneg %p153
        %p237 = pneg %p150
        %s238 = sand.u32 %s140, 1
        %s239 = scalar_lea.sflag [#allocation4], %s238
        %s240 = sand.u32 %s140, 1
        %s241 = smul.addr %s240, 128
        %s242 = scalar_lea.vmem [#allocation5], %s241
        %s243 = smul.u32 16, %s22
        %s244 = smul.u32 16, %s22
        %v246 = vld [vmem:[%s216] sm:$0xff]
        %v247 = vld [vmem:[%s216 + $0x8] sm:$0xff]
        %v248 = vld [vmem:[%s216 + $0x10] sm:$0xff]
        %v249 = vld [vmem:[%s216 + $0x18] sm:$0xff]
        %v250 = vld [vmem:[%s216 + $0x20] sm:$0xff]
        %v251 = vld [vmem:[%s216 + $0x28] sm:$0xff]
        %v252 = vld [vmem:[%s216 + $0x30] sm:$0xff]
        %v253 = vld [vmem:[%s216 + $0x38] sm:$0xff]
        %v254 = vld [vmem:[%s216 + $0x40] sm:$0xff]
        %v255 = vld [vmem:[%s216 + $0x48] sm:$0xff]
        %v256 = vld [vmem:[%s216 + $0x50] sm:$0xff]
        %v257 = vld [vmem:[%s216 + $0x58] sm:$0xff]
        %v258 = vld [vmem:[%s216 + $0x60] sm:$0xff]
        %v259 = vld [vmem:[%s216 + $0x68] sm:$0xff]
        %v260 = vld [vmem:[%s216 + $0x70] sm:$0xff]
        %v261 = vld [vmem:[%s216 + $0x78] sm:$0xff]
        %v262 = vpack.c.bf16 %v247, %v246
        %v263 = vpack.c.bf16 %v249, %v248
        %v264 = vpack.c.bf16 %v251, %v250
        %v265 = vpack.c.bf16 %v253, %v252
        %v266 = vpack.c.bf16 %v255, %v254
        %v267 = vpack.c.bf16 %v257, %v256
        %v268 = vpack.c.bf16 %v259, %v258
        %v269 = vpack.c.bf16 %v261, %v260
        %v270 = vld [vmem:[%s1] sm:$0xf]
        %v271 = vld [vmem:[%s1 + $0x4] sm:$0xf]
        %v272 = vld [vmem:[%s1 + $0x8] sm:$0xf]
        %v273 = vld [vmem:[%s1 + $0xc] sm:$0xf]
        %v274 = vld [vmem:[%s1 + $0x10] sm:$0xf]
        %v275 = vld [vmem:[%s1 + $0x14] sm:$0xf]
        %v276 = vld [vmem:[%s1 + $0x18] sm:$0xf]
        %v277 = vld [vmem:[%s1 + $0x1c] sm:$0xf]
        %v278 = vld [vmem:[%s1 + $0x20] sm:$0xf]
        %v279 = vld [vmem:[%s1 + $0x24] sm:$0xf]
        %v280 = vld [vmem:[%s1 + $0x28] sm:$0xf]
        %v281 = vld [vmem:[%s1 + $0x2c] sm:$0xf]
        %v282 = vld [vmem:[%s1 + $0x30] sm:$0xf]
        %v283 = vld [vmem:[%s1 + $0x34] sm:$0xf]
        %v284 = vld [vmem:[%s1 + $0x38] sm:$0xf]
        %v285 = vld [vmem:[%s1 + $0x3c] sm:$0xf]
        %v286 = vld [vmem:[%s2] sm:$0x1]
        %v288 = vlaneseq
        %v289 = vshrl.u32 %v288, 7
        %v290 = vsub.s32 0, %v289
        %v291 = vrot.slane %v286, %v290
        %v309 = vunpack.c.l.b16 %v270
        %v310 = vunpack.c.l.b16 %v271
        %v311 = vunpack.c.l.b16 %v272
        %v312 = vunpack.c.l.b16 %v273
        %v313 = vunpack.c.l.b16 %v274
        %v314 = vunpack.c.l.b16 %v275
        %v315 = vunpack.c.l.b16 %v276
        %v316 = vunpack.c.l.b16 %v277
        %v317 = vunpack.c.l.b16 %v278
        %v318 = vunpack.c.l.b16 %v279
        %v319 = vunpack.c.l.b16 %v280
        %v320 = vunpack.c.l.b16 %v281
        %v321 = vunpack.c.l.b16 %v282
        %v322 = vunpack.c.l.b16 %v283
        %v323 = vunpack.c.l.b16 %v284
        %v324 = vunpack.c.l.b16 %v285
        %v325 = vpack.c.b16 %v310, %v309
        %v326 = vpack.c.b16 %v312, %v311
        %v327 = vpack.c.b16 %v314, %v313
        %v328 = vpack.c.b16 %v316, %v315
        %v329 = vpack.c.b16 %v318, %v317
        %v330 = vpack.c.b16 %v320, %v319
        %v331 = vpack.c.b16 %v322, %v321
        %v332 = vpack.c.b16 %v324, %v323
        %341 = vmatprep.subr.bf16.mxu0 0
        %342 = vmatpush1.bf16.msra.mxu0 %v325
        %343 = vmatprep.subr.bf16.mxu0 0
        %344 = vmatpush1.bf16.msra.mxu0 %v326
        %345 = vmatprep.subr.bf16.mxu0 0
        %346 = vmatpush1.bf16.msra.mxu0 %v327
        %347 = vmatprep.subr.bf16.mxu0 0
        %348 = vmatpush1.bf16.msra.mxu0 %v328
        %349 = vmatprep.subr.bf16.mxu0 0
        %350 = vmatpush1.bf16.msra.mxu0 %v329
        %351 = vmatprep.subr.bf16.mxu0 0
        %352 = vmatpush1.bf16.msra.mxu0 %v330
        %353 = vmatprep.subr.bf16.mxu0 0
        %354 = vmatpush1.bf16.msra.mxu0 %v331
        %355 = vmatprep.subr.bf16.mxu0 0
        %356 = vmatpush1.bf16.msra.mxu0 %v332
        %357 = vmatprep.subr.bf16.mxu0 0
        %358 = vmatpush1.bf16.msra.mxu0 0
        %359 = vmatprep.subr.bf16.mxu0 0
        %360 = vmatpush1.bf16.msra.mxu0 0
        %361 = vmatprep.subr.bf16.mxu0 0
        %362 = vmatpush1.bf16.msra.mxu0 0
        %363 = vmatprep.subr.bf16.mxu0 0
        %364 = vmatpush1.bf16.msra.mxu0 0
        %365 = vmatprep.subr.bf16.mxu0 0
        %366 = vmatpush1.bf16.msra.mxu0 0
        %367 = vmatprep.subr.bf16.mxu0 0
        %368 = vmatpush1.bf16.msra.mxu0 0
        %369 = vmatprep.subr.bf16.mxu0 0
        %370 = vmatpush1.bf16.msra.mxu0 0
        %371 = vmatprep.subr.bf16.mxu0 0
        %372 = vmatpush1.bf16.msra.mxu0 0
        %373 = vmatprep.mubr.bf16.mxu0 0
        %374 = vmatmul.mubr.bf16.gmra.mrb[0].mxu0 %v262
        %v375 = vpop.f32.mrb[0].mxu0
        %v376 = vadd.f32 %v291, %v375
        %v377 = vpop.f32.mrb[0].mxu0
        %v378 = vpop.f32.mrb[0].mxu0
        %v379 = vadd.f32 %v291, %v378
        %v380 = vpop.f32.mrb[0].mxu0
        %381 = vmatprep.mubr.bf16.mxu0 0
        %382 = vmatmul.mubr.bf16.gmra.mrb[0].mxu0 %v263
        %v383 = vpop.f32.mrb[0].mxu0
        %v384 = vadd.f32 %v291, %v383
        %v385 = vpop.f32.mrb[0].mxu0
        %v386 = vpop.f32.mrb[0].mxu0
        %v387 = vadd.f32 %v291, %v386
        %v388 = vpop.f32.mrb[0].mxu0
        %389 = vmatprep.mubr.bf16.mxu0 0
        %390 = vmatmul.mubr.bf16.gmra.mrb[0].mxu0 %v264
        %v391 = vpop.f32.mrb[0].mxu0
        %v392 = vadd.f32 %v291, %v391
        %v393 = vpop.f32.mrb[0].mxu0
        %v394 = vpop.f32.mrb[0].mxu0
        %v395 = vadd.f32 %v291, %v394
        %v396 = vpop.f32.mrb[0].mxu0
        %397 = vmatprep.mubr.bf16.mxu0 0
        %398 = vmatmul.mubr.bf16.gmra.mrb[0].mxu0 %v265
        %v399 = vpop.f32.mrb[0].mxu0
        %v400 = vadd.f32 %v291, %v399
        %v401 = vpop.f32.mrb[0].mxu0
        %v402 = vpop.f32.mrb[0].mxu0
        %v403 = vadd.f32 %v291, %v402
        %v404 = vpop.f32.mrb[0].mxu0
        %405 = vmatprep.mubr.bf16.mxu0 0
        %406 = vmatmul.mubr.bf16.gmra.mrb[0].mxu0 %v266
        %v407 = vpop.f32.mrb[0].mxu0
        %v408 = vadd.f32 %v291, %v407
        %v409 = vpop.f32.mrb[0].mxu0
        %v410 = vpop.f32.mrb[0].mxu0
        %v411 = vadd.f32 %v291, %v410
        %v412 = vpop.f32.mrb[0].mxu0
        %413 = vmatprep.mubr.bf16.mxu0 0
        %414 = vmatmul.mubr.bf16.gmra.mrb[0].mxu0 %v267
        %v415 = vpop.f32.mrb[0].mxu0
        %v416 = vadd.f32 %v291, %v415
        %v417 = vpop.f32.mrb[0].mxu0
        %v418 = vpop.f32.mrb[0].mxu0
        %v419 = vadd.f32 %v291, %v418
        %v420 = vpop.f32.mrb[0].mxu0
        %421 = vmatprep.mubr.bf16.mxu0 0
        %422 = vmatmul.mubr.bf16.gmra.mrb[0].mxu0 %v268
        %v423 = vpop.f32.mrb[0].mxu0
        %v424 = vadd.f32 %v291, %v423
        %v425 = vpop.f32.mrb[0].mxu0
        %v426 = vpop.f32.mrb[0].mxu0
        %v427 = vadd.f32 %v291, %v426
        %v428 = vpop.f32.mrb[0].mxu0
        %429 = vmatprep.mubr.bf16.mxu0 0
        %430 = vmatmul.mubr.bf16.gmra.mrb[0].mxu0 %v269
        %v431 = vpop.f32.mrb[0].mxu0
        %v432 = vadd.f32 %v291, %v431
        %v433 = vpop.f32.mrb[0].mxu0
        %v434 = vpop.f32.mrb[0].mxu0
        %v435 = vadd.f32 %v291, %v434
        %v436 = vpop.f32.mrb[0].mxu0
        %437 = vdwg.mxu0
        %v438 = vmax.f32 %v376, 0.0
        %v439 = vmax.f32 %v379, 0.0
        %v440 = vmax.f32 %v384, 0.0
        %v441 = vmax.f32 %v387, 0.0
        %v442 = vmax.f32 %v392, 0.0
        %v443 = vmax.f32 %v395, 0.0
        %v444 = vmax.f32 %v400, 0.0
        %v445 = vmax.f32 %v403, 0.0
        %v446 = vmax.f32 %v408, 0.0
        %v447 = vmax.f32 %v411, 0.0
        %v448 = vmax.f32 %v416, 0.0
        %v449 = vmax.f32 %v419, 0.0
        %v450 = vmax.f32 %v424, 0.0
        %v451 = vmax.f32 %v427, 0.0
        %v452 = vmax.f32 %v432, 0.0
        %v453 = vmax.f32 %v435, 0.0
        %v454 = vpack.c.bf16 %v439, %v438
        %v455 = vpack.c.bf16 %v441, %v440
        %v456 = vpack.c.bf16 %v443, %v442
        %v457 = vpack.c.bf16 %v445, %v444
        %v458 = vpack.c.bf16 %v447, %v446
        %v459 = vpack.c.bf16 %v449, %v448
        %v460 = vpack.c.bf16 %v451, %v450
        %v461 = vpack.c.bf16 %v453, %v452
        %v462 = vld [vmem:[%s3] sm:$0xf]
        %v463 = vld [vmem:[%s3 + $0x4] sm:$0xf]
        %v464 = vld [vmem:[%s3 + $0x8] sm:$0xf]
        %v465 = vld [vmem:[%s3 + $0xc] sm:$0xf]
        %v466 = vld [vmem:[%s3 + $0x10] sm:$0xf]
        %v467 = vld [vmem:[%s3 + $0x14] sm:$0xf]
        %v468 = vld [vmem:[%s3 + $0x18] sm:$0xf]
        %v469 = vld [vmem:[%s3 + $0x1c] sm:$0xf]
        %v470 = vld [vmem:[%s3 + $0x20] sm:$0xf]
        %v471 = vld [vmem:[%s3 + $0x24] sm:$0xf]
        %v472 = vld [vmem:[%s3 + $0x28] sm:$0xf]
        %v473 = vld [vmem:[%s3 + $0x2c] sm:$0xf]
        %v474 = vld [vmem:[%s3 + $0x30] sm:$0xf]
        %v475 = vld [vmem:[%s3 + $0x34] sm:$0xf]
        %v476 = vld [vmem:[%s3 + $0x38] sm:$0xf]
        %v477 = vld [vmem:[%s3 + $0x3c] sm:$0xf]
        %v478 = vld [vmem:[%s4] sm:$0x1]
        %v480 = vlaneseq
        %v481 = vshrl.u32 %v480, 7
        %v482 = vsub.s32 0, %v481
        %v483 = vrot.slane %v478, %v482
        %v501 = vunpack.c.l.b16 %v462
        %v502 = vunpack.c.l.b16 %v463
        %v503 = vunpack.c.l.b16 %v464
        %v504 = vunpack.c.l.b16 %v465
        %v505 = vunpack.c.l.b16 %v466
        %v506 = vunpack.c.l.b16 %v467
        %v507 = vunpack.c.l.b16 %v468
        %v508 = vunpack.c.l.b16 %v469
        %v509 = vunpack.c.l.b16 %v470
        %v510 = vunpack.c.l.b16 %v471
        %v511 = vunpack.c.l.b16 %v472
        %v512 = vunpack.c.l.b16 %v473
        %v513 = vunpack.c.l.b16 %v474
        %v514 = vunpack.c.l.b16 %v475
        %v515 = vunpack.c.l.b16 %v476
        %v516 = vunpack.c.l.b16 %v477
        %v517 = vpack.c.b16 %v502, %v501
        %v518 = vpack.c.b16 %v504, %v503
        %v519 = vpack.c.b16 %v506, %v505
        %v520 = vpack.c.b16 %v508, %v507
        %v521 = vpack.c.b16 %v510, %v509
        %v522 = vpack.c.b16 %v512, %v511
        %v523 = vpack.c.b16 %v514, %v513
        %v524 = vpack.c.b16 %v516, %v515
        %533 = vmatprep.subr.bf16.mxu0 0
        %534 = vmatpush1.bf16.msra.mxu0 %v517
        %535 = vmatprep.subr.bf16.mxu0 0
        %536 = vmatpush1.bf16.msra.mxu0 %v518
        %537 = vmatprep.subr.bf16.mxu0 0
        %538 = vmatpush1.bf16.msra.mxu0 %v519
        %539 = vmatprep.subr.bf16.mxu0 0
        %540 = vmatpush1.bf16.msra.mxu0 %v520
        %541 = vmatprep.subr.bf16.mxu0 0
        %542 = vmatpush1.bf16.msra.mxu0 %v521
        %543 = vmatprep.subr.bf16.mxu0 0
        %544 = vmatpush1.bf16.msra.mxu0 %v522
        %545 = vmatprep.subr.bf16.mxu0 0
        %546 = vmatpush1.bf16.msra.mxu0 %v523
        %547 = vmatprep.subr.bf16.mxu0 0
        %548 = vmatpush1.bf16.msra.mxu0 %v524
        %549 = vmatprep.subr.bf16.mxu0 0
        %550 = vmatpush1.bf16.msra.mxu0 0
        %551 = vmatprep.subr.bf16.mxu0 0
        %552 = vmatpush1.bf16.msra.mxu0 0
        %553 = vmatprep.subr.bf16.mxu0 0
        %554 = vmatpush1.bf16.msra.mxu0 0
        %555 = vmatprep.subr.bf16.mxu0 0
        %556 = vmatpush1.bf16.msra.mxu0 0
        %557 = vmatprep.subr.bf16.mxu0 0
        %558 = vmatpush1.bf16.msra.mxu0 0
        %559 = vmatprep.subr.bf16.mxu0 0
        %560 = vmatpush1.bf16.msra.mxu0 0
        %561 = vmatprep.subr.bf16.mxu0 0
        %562 = vmatpush1.bf16.msra.mxu0 0
        %563 = vmatprep.subr.bf16.mxu0 0
        %564 = vmatpush1.bf16.msra.mxu0 0
        %565 = vmatprep.mubr.bf16.mxu0 0
        %566 = vmatmul.mubr.bf16.gmra.mrb[0].mxu0 %v454
        %v567 = vpop.f32.mrb[0].mxu0
        %v568 = vadd.f32 %v483, %v567
        %v569 = vpop.f32.mrb[0].mxu0
        %v570 = vpop.f32.mrb[0].mxu0
        %v571 = vadd.f32 %v483, %v570
        %v572 = vpop.f32.mrb[0].mxu0
        %573 = vmatprep.mubr.bf16.mxu0 0
        %574 = vmatmul.mubr.bf16.gmra.mrb[0].mxu0 %v455
        %v575 = vpop.f32.mrb[0].mxu0
        %v576 = vadd.f32 %v483, %v575
        %v577 = vpop.f32.mrb[0].mxu0
        %v578 = vpop.f32.mrb[0].mxu0
        %v579 = vadd.f32 %v483, %v578
        %v580 = vpop.f32.mrb[0].mxu0
        %581 = vmatprep.mubr.bf16.mxu0 0
        %582 = vmatmul.mubr.bf16.gmra.mrb[0].mxu0 %v456
        %v583 = vpop.f32.mrb[0].mxu0
        %v584 = vadd.f32 %v483, %v583
        %v585 = vpop.f32.mrb[0].mxu0
        %v586 = vpop.f32.mrb[0].mxu0
        %v587 = vadd.f32 %v483, %v586
        %v588 = vpop.f32.mrb[0].mxu0
        %589 = vmatprep.mubr.bf16.mxu0 0
        %590 = vmatmul.mubr.bf16.gmra.mrb[0].mxu0 %v457
        %v591 = vpop.f32.mrb[0].mxu0
        %v592 = vadd.f32 %v483, %v591
        %v593 = vpop.f32.mrb[0].mxu0
        %v594 = vpop.f32.mrb[0].mxu0
        %v595 = vadd.f32 %v483, %v594
        %v596 = vpop.f32.mrb[0].mxu0
        %597 = vmatprep.mubr.bf16.mxu0 0
        %598 = vmatmul.mubr.bf16.gmra.mrb[0].mxu0 %v458
        %v599 = vpop.f32.mrb[0].mxu0
        %v600 = vadd.f32 %v483, %v599
        %v601 = vpop.f32.mrb[0].mxu0
        %v602 = vpop.f32.mrb[0].mxu0
        %v603 = vadd.f32 %v483, %v602
        %v604 = vpop.f32.mrb[0].mxu0
        %605 = vmatprep.mubr.bf16.mxu0 0
        %606 = vmatmul.mubr.bf16.gmra.mrb[0].mxu0 %v459
        %v607 = vpop.f32.mrb[0].mxu0
        %v608 = vadd.f32 %v483, %v607
        %v609 = vpop.f32.mrb[0].mxu0
        %v610 = vpop.f32.mrb[0].mxu0
        %v611 = vadd.f32 %v483, %v610
        %v612 = vpop.f32.mrb[0].mxu0
        %613 = vmatprep.mubr.bf16.mxu0 0
        %614 = vmatmul.mubr.bf16.gmra.mrb[0].mxu0 %v460
        %v615 = vpop.f32.mrb[0].mxu0
        %v616 = vadd.f32 %v483, %v615
        %v617 = vpop.f32.mrb[0].mxu0
        %v618 = vpop.f32.mrb[0].mxu0
        %v619 = vadd.f32 %v483, %v618
        %v620 = vpop.f32.mrb[0].mxu0
        %621 = vmatprep.mubr.bf16.mxu0 0
        %622 = vmatmul.mubr.bf16.gmra.mrb[0].mxu0 %v461
        %v623 = vpop.f32.mrb[0].mxu0
        %v624 = vadd.f32 %v483, %v623
        %v625 = vpop.f32.mrb[0].mxu0
        %v626 = vpop.f32.mrb[0].mxu0
        %v627 = vadd.f32 %v483, %v626
        %v628 = vpop.f32.mrb[0].mxu0
        %629 = vdwg.mxu0
        %v630 = vmax.f32 %v568, 0.0
        %v631 = vmax.f32 %v571, 0.0
        %v632 = vmax.f32 %v576, 0.0
        %v633 = vmax.f32 %v579, 0.0
        %v634 = vmax.f32 %v584, 0.0
        %v635 = vmax.f32 %v587, 0.0
        %v636 = vmax.f32 %v592, 0.0
        %v637 = vmax.f32 %v595, 0.0
        %v638 = vmax.f32 %v600, 0.0
        %v639 = vmax.f32 %v603, 0.0
        %v640 = vmax.f32 %v608, 0.0
        %v641 = vmax.f32 %v611, 0.0
        %v642 = vmax.f32 %v616, 0.0
        %v643 = vmax.f32 %v619, 0.0
        %v644 = vmax.f32 %v624, 0.0
        %v645 = vmax.f32 %v627, 0.0
        %v646 = vadd.f32 %v630, %v246
        %v647 = vadd.f32 %v631, %v247
        %v648 = vadd.f32 %v632, %v248
        %v649 = vadd.f32 %v633, %v249
        %v650 = vadd.f32 %v634, %v250
        %v651 = vadd.f32 %v635, %v251
        %v652 = vadd.f32 %v636, %v252
        %v653 = vadd.f32 %v637, %v253
        %v654 = vadd.f32 %v638, %v254
        %v655 = vadd.f32 %v639, %v255
        %v656 = vadd.f32 %v640, %v256
        %v657 = vadd.f32 %v641, %v257
        %v658 = vadd.f32 %v642, %v258
        %v659 = vadd.f32 %v643, %v259
        %v660 = vadd.f32 %v644, %v260
        %v661 = vadd.f32 %v645, %v261
        %662 = vst [vmem:[%s242] sm:$0xff] %v646
        %663 = vst [vmem:[%s242 + $0x8] sm:$0xff] %v647
        %664 = vst [vmem:[%s242 + $0x10] sm:$0xff] %v648
        %665 = vst [vmem:[%s242 + $0x18] sm:$0xff] %v649
        %666 = vst [vmem:[%s242 + $0x20] sm:$0xff] %v650
        %667 = vst [vmem:[%s242 + $0x28] sm:$0xff] %v651
        %668 = vst [vmem:[%s242 + $0x30] sm:$0xff] %v652
        %669 = vst [vmem:[%s242 + $0x38] sm:$0xff] %v653
        %670 = vst [vmem:[%s242 + $0x40] sm:$0xff] %v654
        %671 = vst [vmem:[%s242 + $0x48] sm:$0xff] %v655
        %672 = vst [vmem:[%s242 + $0x50] sm:$0xff] %v656
        %673 = vst [vmem:[%s242 + $0x58] sm:$0xff] %v657
        %674 = vst [vmem:[%s242 + $0x60] sm:$0xff] %v658
        %675 = vst [vmem:[%s242 + $0x68] sm:$0xff] %v659
        %676 = vst [vmem:[%s242 + $0x70] sm:$0xff] %v660
        %677 = vst [vmem:[%s242 + $0x78] sm:$0xff] %v661
        %s678 = sand.u32 %s140, 1
        %s679 = scalar_lea.sflag [#allocation4], %s678
        %s680 = sand.u32 %s140, 1
        %s681 = smul.addr %s680, 128
        %s682 = scalar_lea.vmem [#allocation5], %s681
        // Predicated region
        $region45: #{tpu_custom_call.1} parent=39 // pred_check
          %p683 = pneg %p150
        $region46: #{tpu_custom_call.1} parent=39 // pred_check_branch
          %685 = sbr.rel (%p683) target = $region48
        $region47: #{tpu_custom_call.1} parent=39 // pred_region
          %s686 = smul.u32 16, %s22
          %s688 = ssub.s32 2048, 2048
          %689 = vsyncadd %s679, %s688
          %s690 = smul.addr %s686, 128
          %s691 = scalar_lea.hbm %s5, %s690
          %s692 = sshll.u32 %s682, 4
          %s693 = int_to_ptr.vmem [resolvable:$true] %s692
          %698 = dma.vmem_to_hbm [thread:$0]  %s693, 2048, %s691, %s679, 128, 128, 8
        $region48: #{tpu_custom_call.1} parent=39 // pred_fallthru
          _
      $region40: #{tpu_custom_call.1} parent=5 // pred_fallthru
        _
      %p699 = scmp.le.s32.totalorder 2, %s17
      // Predicated region
      $region49: #{tpu_custom_call.1} parent=5 // pred_check
        %p700 = pneg %p699
      $region50: #{tpu_custom_call.1} parent=5 // pred_check_branch
        %702 = sbr.rel (%p700) target = $region52
      $region51: #{tpu_custom_call.1} parent=5 // pred_region
        %s703 = ssub.s32 %s17, 2
        // Predicated region
        $region53: #{tpu_custom_call.1} parent=51 // pred_check
          %p704 = pneg %p156
        $region54: #{tpu_custom_call.1} parent=51 // pred_check_branch
          %706 = sbr.rel (%p704) target = $region56
        $region55: #{tpu_custom_call.1} parent=51 // pred_region
          %s707 = sand.u32 %s141, 1
          %s708 = scalar_lea.sflag [#allocation4], %s707
          %s709 = sand.u32 %s141, 1
          %s710 = smul.addr %s709, 128
          %s711 = scalar_lea.vmem [#allocation5], %s710
          %712 = dma.done %s708, 2048
        $region56: #{tpu_custom_call.1} parent=51 // pred_fallthru
          _
      $region52: #{tpu_custom_call.1} parent=5 // pred_fallthru
        _
    $region6: #{tpu_custom_call.1} parent=1 // loop_footer
      %s21 = sadd.s32 1, %s17
    $region7: #{tpu_custom_call.1} parent=1 // loop_footer_branch
      %16 = sbr.rel target = $region3
    $region8: #{tpu_custom_call.1} parent=1 // loop_exit
      _
    %713 = vsyncpa [#allocation3], 1
    %s714 = scalar_lea.sflag [#allocation3], 1
    %715 = vsyncpa %s714, 1
    %716 = vsyncpa [#allocation4], 1
    %s717 = scalar_lea.sflag [#allocation4], 1
    %718 = vsyncpa %s717, 1

</llo_original>
